<compile_context>
chip_gen: v5e
topology: v5e:2x2
jax: 0.10.0
libtpu: 0.0.40
codegen_flags: <defaults>
</compile_context>

<pallas_src>
import functools

import jax
import jax.numpy as jnp
from jax.experimental import pallas as pl
from jax.experimental.pallas import tpu as pltpu


def _round_up(x, m):
    return (x + m - 1) // m * m


# ----------------------------- Pallas kernel ------------------------------

def _maxout_linear_kernel(x_ref, w1_ref, b1_ref, w2_ref, b2_ref, *rest, has_bn):
    # max(x @ W1 + b1, x @ W2 + b2) [* bn_scale + bn_shift]
    if has_bn:
        scale_ref, shift_ref, o_ref, acc1_ref, acc2_ref = rest
    else:
        o_ref, acc1_ref, acc2_ref = rest

    k = pl.program_id(2)

    @pl.when(k == 0)
    def _():
        acc1_ref[...] = jnp.zeros_like(acc1_ref)
        acc2_ref[...] = jnp.zeros_like(acc2_ref)

    x = x_ref[...]  # shared activation tile feeds both MXU matmuls
    acc1_ref[...] += jnp.dot(x, w1_ref[...], preferred_element_type=jnp.float32)
    acc2_ref[...] += jnp.dot(x, w2_ref[...], preferred_element_type=jnp.float32)

    @pl.when(k == pl.num_programs(2) - 1)
    def _():
        y1 = acc1_ref[...] + b1_ref[...].astype(jnp.float32)
        y2 = acc2_ref[...] + b2_ref[...].astype(jnp.float32)
        y = jnp.maximum(y1, y2)
        if has_bn:
            y = (y * scale_ref[...].astype(jnp.float32)
                 + shift_ref[...].astype(jnp.float32))
        o_ref[...] = y.astype(o_ref.dtype)


def maxout_linear_pallas(x, w1, b1, w2, b2, bn_scale=None, bn_shift=None,
                         *, tm=256, tn=256, tk=512):
    """x: (M, K); w: (K, N); returns (M, N)."""
    M, K = x.shape
    Kw, N = w1.shape
    assert Kw == K and w2.shape == (K, N)
    has_bn = bn_scale is not None

    # Tile sizes: respect the (8, 128) layout constraint, shrink for tiny
    # problems; at large sizes stay well under v7x's 64 MiB VMEM.
    tm = min(tm, _round_up(M, 8))
    tn = min(tn, _round_up(N, 128))
    tk = min(tk, _round_up(K, 128))
    Mp, Np, Kp = _round_up(M, tm), _round_up(N, tn), _round_up(K, tk)

    xp = jnp.pad(x, ((0, Mp - M), (0, Kp - K)))
    w1p = jnp.pad(w1, ((0, Kp - K), (0, Np - N)))
    w2p = jnp.pad(w2, ((0, Kp - K), (0, Np - N)))
    b1p = jnp.pad(b1, (0, Np - N)).reshape(1, Np)
    b2p = jnp.pad(b2, (0, Np - N)).reshape(1, Np)

    args = [xp, w1p, b1p, w2p, b2p]
    in_specs = [
        pl.BlockSpec((tm, tk), lambda i, j, k: (i, k)),
        pl.BlockSpec((tk, tn), lambda i, j, k: (k, j)),
        pl.BlockSpec((1, tn), lambda i, j, k: (0, j)),
        pl.BlockSpec((tk, tn), lambda i, j, k: (k, j)),
        pl.BlockSpec((1, tn), lambda i, j, k: (0, j)),
    ]
    if has_bn:
        sp = jnp.pad(bn_scale, (0, Np - N), constant_values=1.0).reshape(1, Np)
        shp = jnp.pad(bn_shift, (0, Np - N)).reshape(1, Np)
        args += [sp, shp]
        in_specs += [pl.BlockSpec((1, tn), lambda i, j, k: (0, j)),
                     pl.BlockSpec((1, tn), lambda i, j, k: (0, j))]

    out = pl.pallas_call(
        functools.partial(_maxout_linear_kernel, has_bn=has_bn),
        out_shape=jax.ShapeDtypeStruct((Mp, Np), x.dtype),
        grid_spec=pltpu.PrefetchScalarGridSpec(
            num_scalar_prefetch=0,
            grid=(Mp // tm, Np // tn, Kp // tk),
            in_specs=in_specs,
            out_specs=pl.BlockSpec((tm, tn), lambda i, j, k: (i, j)),
            scratch_shapes=[pltpu.VMEM((tm, tn), jnp.float32),
                            pltpu.VMEM((tm, tn), jnp.float32)]),
        compiler_params=pltpu.CompilerParams(
            dimension_semantics=("parallel", "parallel", "arbitrary")),
    )(*args)

    return out[:M, :N]


# ----------------------------- module forward -----------------------------

def maxout_segment_level_forward(x, params, *, enable_batch_norm, eps=1e-5):
    """x: (batch, input_dim[0]) -> (batch, output_dim[-1]).

    Mirrors MaxoutSegmentLevel.forward: per layer
      x = max(linear1(x), linear2(x)); if enable_batch_norm: x = bn(x)
    BN is BatchNorm1d(affine=False) in eval mode (running stats).
    """
    # TODO(synk): training-mode BatchNorm (batch statistics) is not implemented;
    # the kernel folds eval-mode running stats into a fused scale/shift.
    h = x
    for lp in params["layers"]:
        if enable_batch_norm:
            inv_std = jax.lax.rsqrt(lp["running_var"] + eps)
            scale = inv_std
            shift = -lp["running_mean"] * inv_std
            h = maxout_linear_pallas(h, lp["w1"], lp["b1"], lp["w2"], lp["b2"],
                                     scale, shift)
        else:
            h = maxout_linear_pallas(h, lp["w1"], lp["b1"], lp["w2"], lp["b2"])
    return h


# --------------------------- pure-JAX reference ----------------------------

def maxout_segment_level_ref(x, params, *, enable_batch_norm, eps=1e-5):
    h = x
    for lp in params["layers"]:
        y = jnp.maximum(h @ lp["w1"] + lp["b1"], h @ lp["w2"] + lp["b2"])
        if enable_batch_norm:
            y = (y - lp["running_mean"]) * jax.lax.rsqrt(lp["running_var"] + eps)
        h = y
    return h


# --------------------------------- test ------------------------------------

def _init_params(key, input_dim, output_dim):
    params = {"layers": []}
    keys = iter(jax.random.split(key, len(input_dim) * 6))
    for din, dout in zip(input_dim, output_dim):
        lp = {
            "w1": 0.1 * jax.random.normal(next(keys), (din, dout), jnp.float32),
            "b1": 0.1 * jax.random.normal(next(keys), (dout,), jnp.float32),
            "w2": 0.1 * jax.random.normal(next(keys), (din, dout), jnp.float32),
            "b2": 0.1 * jax.random.normal(next(keys), (dout,), jnp.float32),
            "running_mean": 0.1 * jax.random.normal(next(keys), (dout,), jnp.float32),
            "running_var": 0.5 + jax.random.uniform(next(keys), (dout,), jnp.float32),
        }
        params["layers"].append(lp)
    return params


if __name__ == "__main__":
    key = jax.random.PRNGKey(0)
    kx, kp, km = jax.random.split(key, 3)

    # Small shapes consistent with the module: two Maxout layers + BN.
    input_dim = [20, 48]
    output_dim = [48, 24]
    batch = 6
    enable_batch_norm = True

    x = jax.random.normal(kx, (batch, input_dim[0]), jnp.float32)
    params = _init_params(kp, input_dim, output_dim)

    out = maxout_segment_level_forward(x, params,
                                       enable_batch_norm=enable_batch_norm)
    out = jax.block_until_ready(out)
    ref = maxout_segment_level_ref(x, params,
                                   enable_batch_norm=enable_batch_norm)

    assert out.shape == (batch, output_dim[-1]), out.shape
    assert bool(jnp.all(jnp.isfinite(out)))
    max_err = float(jnp.max(jnp.abs(out - ref)))
    assert max_err < 1e-4, f"mismatch vs reference: {max_err}"

    # Extra smoke test at a size that exercises the multi-tile grid and the
    # K-reduction accumulator path (grid = (2, 2, 2) with default tiles).
    km1, km2, km3, km4, km5 = jax.random.split(km, 5)
    M2, K2, N2 = 272, 640, 384
    x2 = jax.random.normal(km1, (M2, K2), jnp.float32)
    w1 = 0.05 * jax.random.normal(km2, (K2, N2), jnp.float32)
    w2 = 0.05 * jax.random.normal(km3, (K2, N2), jnp.float32)
    b1 = 0.05 * jax.random.normal(km4, (N2,), jnp.float32)
    b2 = 0.05 * jax.random.normal(km5, (N2,), jnp.float32)
    out2 = jax.block_until_ready(maxout_linear_pallas(x2, w1, b1, w2, b2))
    ref2 = jnp.maximum(x2 @ w1 + b1, x2 @ w2 + b2)
    max_err2 = float(jnp.max(jnp.abs(out2 - ref2)))
    assert max_err2 < 1e-4, f"tiled-path mismatch vs reference: {max_err2}"

    print("KERNEL_OK")
</pallas_src>

<mosaic_0001>
module attributes {stable_mosaic.version = 11 : i64} {
  func.func @_maxout_linear_kernel(%arg0: i32, %arg1: i32, %arg2: i32, %arg3: memref<8x128xf32, #tpu.memory_space<vmem>>, %arg4: memref<128x128xf32, #tpu.memory_space<vmem>>, %arg5: memref<1x128xf32, #tpu.memory_space<vmem>>, %arg6: memref<128x128xf32, #tpu.memory_space<vmem>>, %arg7: memref<1x128xf32, #tpu.memory_space<vmem>>, %arg8: memref<1x128xf32, #tpu.memory_space<vmem>>, %arg9: memref<1x128xf32, #tpu.memory_space<vmem>>, %arg10: memref<8x128xf32, #tpu.memory_space<vmem>>, %arg11: memref<8x128xf32, #tpu.memory_space<vmem>>, %arg12: memref<8x128xf32, #tpu.memory_space<vmem>>) attributes {dimension_semantics = [#tpu.dimension_semantics<parallel>, #tpu.dimension_semantics<parallel>, #tpu.dimension_semantics<arbitrary>], iteration_bounds = array<i64: 1, 1, 1>, scalar_prefetch = 0 : i64, scratch_operands = 2 : i64, tpu.core_type = #tpu.core_type<tc>, window_params = [{transform_indices = @transform_0, window_bounds = array<i64: 8, 128>}, {transform_indices = @transform_1, window_bounds = array<i64: 128, 128>}, {transform_indices = @transform_2, window_bounds = array<i64: 1, 128>}, {transform_indices = @transform_3, window_bounds = array<i64: 128, 128>}, {transform_indices = @transform_4, window_bounds = array<i64: 1, 128>}, {transform_indices = @transform_5, window_bounds = array<i64: 1, 128>}, {transform_indices = @transform_6, window_bounds = array<i64: 1, 128>}, {transform_indices = @transform_7, window_bounds = array<i64: 8, 128>}]} {
    %c0_i32 = arith.constant 0 : i32
    %0 = arith.cmpi eq, %arg2, %c0_i32 : i32
    %1 = arith.extui %0 : i1 to i32
    %c0_i32_0 = arith.constant 0 : i32
    %2 = arith.cmpi ne, %1, %c0_i32_0 : i32
    scf.if %2 {
      %cst_17 = arith.constant 0.000000e+00 : f32
      %17 = vector.broadcast %cst_17 : f32 to vector<8x128xf32>
      %c0_18 = arith.constant 0 : index
      %c0_19 = arith.constant 0 : index
      %18 = vector.load %arg11[%c0_18, %c0_19] : memref<8x128xf32, #tpu.memory_space<vmem>>, vector<8x128xf32>
      tpu.vector_store %arg11[%c0_18, %c0_19], %17 {strides = array<i32>} : memref<8x128xf32, #tpu.memory_space<vmem>>, vector<8x128xf32>,
      %cst_20 = arith.constant 0.000000e+00 : f32
      %19 = vector.broadcast %cst_20 : f32 to vector<8x128xf32>
      %c0_21 = arith.constant 0 : index
      %c0_22 = arith.constant 0 : index
      %20 = vector.load %arg12[%c0_21, %c0_22] : memref<8x128xf32, #tpu.memory_space<vmem>>, vector<8x128xf32>
      tpu.vector_store %arg12[%c0_21, %c0_22], %19 {strides = array<i32>} : memref<8x128xf32, #tpu.memory_space<vmem>>, vector<8x128xf32>,
    } else {
    }
    %c0 = arith.constant 0 : index
    %c0_1 = arith.constant 0 : index
    %3 = vector.load %arg3[%c0, %c0_1] : memref<8x128xf32, #tpu.memory_space<vmem>>, vector<8x128xf32>
    %c0_2 = arith.constant 0 : index
    %c0_3 = arith.constant 0 : index
    %4 = vector.load %arg11[%c0_2, %c0_3] : memref<8x128xf32, #tpu.memory_space<vmem>>, vector<8x128xf32>
    %c0_4 = arith.constant 0 : index
    %c0_5 = arith.constant 0 : index
    %5 = vector.load %arg4[%c0_4, %c0_5] : memref<128x128xf32, #tpu.memory_space<vmem>>, vector<128x128xf32>
    %cst = arith.constant dense<0.000000e+00> : vector<8x128xf32>
    %6 = tpu.matmul %3, %5, %cst {dimension_numbers = #tpu.dot_dimension_numbers<[1], [0], [0], [1], [0, 0, 1, 1], [], []>} : vector<8x128xf32>, vector<128x128xf32>, vector<8x128xf32> -> vector<8x128xf32>
    %7 = arith.addf %4, %6 : vector<8x128xf32>
    %c0_6 = arith.constant 0 : index
    %c0_7 = arith.constant 0 : index
    %8 = vector.load %arg11[%c0_6, %c0_7] : memref<8x128xf32, #tpu.memory_space<vmem>>, vector<8x128xf32>
    tpu.vector_store %arg11[%c0_6, %c0_7], %7 {strides = array<i32>} : memref<8x128xf32, #tpu.memory_space<vmem>>, vector<8x128xf32>,
    %c0_8 = arith.constant 0 : index
    %c0_9 = arith.constant 0 : index
    %9 = vector.load %arg12[%c0_8, %c0_9] : memref<8x128xf32, #tpu.memory_space<vmem>>, vector<8x128xf32>
    %c0_10 = arith.constant 0 : index
    %c0_11 = arith.constant 0 : index
    %10 = vector.load %arg6[%c0_10, %c0_11] : memref<128x128xf32, #tpu.memory_space<vmem>>, vector<128x128xf32>
    %cst_12 = arith.constant dense<0.000000e+00> : vector<8x128xf32>
    %11 = tpu.matmul %3, %10, %cst_12 {dimension_numbers = #tpu.dot_dimension_numbers<[1], [0], [0], [1], [0, 0, 1, 1], [], []>} : vector<8x128xf32>, vector<128x128xf32>, vector<8x128xf32> -> vector<8x128xf32>
    %12 = arith.addf %9, %11 : vector<8x128xf32>
    %c0_13 = arith.constant 0 : index
    %c0_14 = arith.constant 0 : index
    %13 = vector.load %arg12[%c0_13, %c0_14] : memref<8x128xf32, #tpu.memory_space<vmem>>, vector<8x128xf32>
    tpu.vector_store %arg12[%c0_13, %c0_14], %12 {strides = array<i32>} : memref<8x128xf32, #tpu.memory_space<vmem>>, vector<8x128xf32>,
    %c0_i32_15 = arith.constant 0 : i32
    %14 = arith.cmpi eq, %arg2, %c0_i32_15 : i32
    %15 = arith.extui %14 : i1 to i32
    %c0_i32_16 = arith.constant 0 : i32
    %16 = arith.cmpi ne, %15, %c0_i32_16 : i32
    scf.if %16 {
      %c0_17 = arith.constant 0 : index
      %c0_18 = arith.constant 0 : index
      %17 = vector.load %arg11[%c0_17, %c0_18] : memref<8x128xf32, #tpu.memory_space<vmem>>, vector<8x128xf32>
      %c0_19 = arith.constant 0 : index
      %c0_20 = arith.constant 0 : index
      %18 = vector.load %arg5[%c0_19, %c0_20] : memref<1x128xf32, #tpu.memory_space<vmem>>, vector<1x128xf32>
      %19 = vector.broadcast %18 : vector<1x128xf32> to vector<8x128xf32>
      %20 = arith.addf %17, %19 : vector<8x128xf32>
      %c0_21 = arith.constant 0 : index
      %c0_22 = arith.constant 0 : index
      %21 = vector.load %arg12[%c0_21, %c0_22] : memref<8x128xf32, #tpu.memory_space<vmem>>, vector<8x128xf32>
      %c0_23 = arith.constant 0 : index
      %c0_24 = arith.constant 0 : index
      %22 = vector.load %arg7[%c0_23, %c0_24] : memref<1x128xf32, #tpu.memory_space<vmem>>, vector<1x128xf32>
      %23 = vector.broadcast %22 : vector<1x128xf32> to vector<8x128xf32>
      %24 = arith.addf %21, %23 : vector<8x128xf32>
      %25 = arith.maximumf %20, %24 : vector<8x128xf32>
      %c0_25 = arith.constant 0 : index
      %c0_26 = arith.constant 0 : index
      %26 = vector.load %arg8[%c0_25, %c0_26] : memref<1x128xf32, #tpu.memory_space<vmem>>, vector<1x128xf32>
      %27 = vector.broadcast %26 : vector<1x128xf32> to vector<8x128xf32>
      %28 = arith.mulf %25, %27 : vector<8x128xf32>
      %c0_27 = arith.constant 0 : index
      %c0_28 = arith.constant 0 : index
      %29 = vector.load %arg9[%c0_27, %c0_28] : memref<1x128xf32, #tpu.memory_space<vmem>>, vector<1x128xf32>
      %30 = vector.broadcast %29 : vector<1x128xf32> to vector<8x128xf32>
      %31 = arith.addf %28, %30 : vector<8x128xf32>
      %c0_29 = arith.constant 0 : index
      %c0_30 = arith.constant 0 : index
      %32 = vector.load %arg10[%c0_29, %c0_30] : memref<8x128xf32, #tpu.memory_space<vmem>>, vector<8x128xf32>
      tpu.vector_store %arg10[%c0_29, %c0_30], %31 {strides = array<i32>} : memref<8x128xf32, #tpu.memory_space<vmem>>, vector<8x128xf32>,
    } else {
    }
    return
  }
  func.func @transform_0(%arg0: i32, %arg1: i32, %arg2: i32) -> (i32, i32) {
    %c0_i32 = arith.constant 0 : i32
    return %arg0, %arg2 : i32, i32
  }
  func.func @transform_1(%arg0: i32, %arg1: i32, %arg2: i32) -> (i32, i32) {
    %c0_i32 = arith.constant 0 : i32
    return %arg2, %arg1 : i32, i32
  }
  func.func @transform_2(%arg0: i32, %arg1: i32, %arg2: i32) -> (i32, i32) {
    %c0_i32 = arith.constant 0 : i32
    %c0_i32_0 = arith.constant 0 : i32
    return %c0_i32, %arg1 : i32, i32
  }
  func.func @transform_3(%arg0: i32, %arg1: i32, %arg2: i32) -> (i32, i32) {
    %c0_i32 = arith.constant 0 : i32
    return %arg2, %arg1 : i32, i32
  }
  func.func @transform_4(%arg0: i32, %arg1: i32, %arg2: i32) -> (i32, i32) {
    %c0_i32 = arith.constant 0 : i32
    %c0_i32_0 = arith.constant 0 : i32
    return %c0_i32, %arg1 : i32, i32
  }
  func.func @transform_5(%arg0: i32, %arg1: i32, %arg2: i32) -> (i32, i32) {
    %c0_i32 = arith.constant 0 : i32
    %c0_i32_0 = arith.constant 0 : i32
    return %c0_i32, %arg1 : i32, i32
  }
  func.func @transform_6(%arg0: i32, %arg1: i32, %arg2: i32) -> (i32, i32) {
    %c0_i32 = arith.constant 0 : i32
    %c0_i32_0 = arith.constant 0 : i32
    return %c0_i32, %arg1 : i32, i32
  }
  func.func @transform_7(%arg0: i32, %arg1: i32, %arg2: i32) -> (i32, i32) {
    %c0_i32 = arith.constant 0 : i32
    return %arg0, %arg1 : i32, i32
  }
}

</mosaic_0001>

<llo_original>
// kernel: tpu_custom_call.1
$region0: #{tpu_custom_call.1}
  #allocation0 [shape = 'u32[]', space=smem, size = 0x4, offset = 0x4, fixed_abs, tag = 'smem constant byte address 0x4 - core index']
  #allocation1 [shape = 'u32[72,128]{1,0:T(1,128)}', space=vmem, size = 0x9000, scoped, tag = 'internal scratch']
  #allocation2 [shape = 'f32[8,128]{1,0:T(8,128)}', space=vmem, size = 0x1000, scoped, tag = 'scratch operand']
  #allocation3 [shape = 'f32[8,128]{1,0:T(8,128)}', space=vmem, size = 0x1000, scoped, tag = 'scratch operand']
  %s0 = inlined_call_operand.hbm [shape: f32[8,128], index: 0, kind: input, shape index: {}]
  %s1 = inlined_call_operand.hbm [shape: f32[128,128], index: 1, kind: input, shape index: {}]
  %s2 = inlined_call_operand.vmem [shape: f32[1,128], index: 2, kind: input, shape index: {}]
  %s3 = inlined_call_operand.hbm [shape: f32[128,128], index: 3, kind: input, shape index: {}]
  %s4 = inlined_call_operand.vmem [shape: f32[1,128], index: 4, kind: input, shape index: {}]
  %s5 = inlined_call_operand.vmem [shape: f32[1,128], index: 5, kind: input, shape index: {}]
  %s6 = inlined_call_operand.vmem [shape: f32[1,128], index: 6, kind: input, shape index: {}]
  %s7 = inlined_call_operand.hbm [shape: f32[8,128], index: 7, kind: output, shape index: {}]
  %s8 = sld [smem:[#allocation0]]
  $region58: #{tpu_custom_call.1} parent=0
    _
  %s10 = ssub.s32 1, %s8
  %s11 = scalar_select 0, %s10, %s8
  $region1: #{tpu_custom_call.1} parent=0
    #allocation4 [shape = 'u8[4096]{0}', space=vmem, size = 0x1000, scoped, tag = 'input window, operand 0, single buffered']
    #allocation5 [shape = 's32[1]{0}', space=sflag, size = 0x4, scoped, tag = 'scoped memory for tpu_custom_call.1']
    #allocation6 [shape = 's32[1]{0}', space=sflag, size = 0x4, scoped, tag = 'scoped memory for tpu_custom_call.1']
    #allocation7 [shape = 'u8[65536]{0}', space=vmem, size = 0x10000, scoped, tag = 'input window, operand 1, single buffered']
    #allocation8 [shape = 's32[1]{0}', space=sflag, size = 0x4, scoped, tag = 'scoped memory for tpu_custom_call.1']
    #allocation9 [shape = 'u8[65536]{0}', space=vmem, size = 0x10000, scoped, tag = 'input window, operand 3, single buffered']
    #allocation10 [shape = 'u8[4096]{0}', space=vmem, size = 0x1000, scoped, tag = 'output window, operand 0, single buffered']
    %12 = vsyncpa [#allocation5], 0
    %13 = vsyncpa [#allocation8], 0
    %14 = vsyncpa [#allocation6], 0
    // Predicated region
    $region2: #{tpu_custom_call.1} parent=1 // pred_check
      _
    $region3: #{tpu_custom_call.1} parent=1 // pred_check_branch
      %16 = sbr.rel (0) target = $region5
    $region4: #{tpu_custom_call.1} parent=1 // pred_region
      %18 = vsyncadd [#allocation5], 0
      %s20 = sshll.u32 %s0, 4
      %s21 = int_to_ptr.hbm [resolvable:$true] %s20
      %s22 = sshll.u32 [#allocation4], 4
      %s23 = int_to_ptr.vmem [resolvable:$true] %s22
      %25 = dma.hbm_to_vmem [thread:$0]  %s21, 128, %s23, [#allocation5]
    $region5: #{tpu_custom_call.1} parent=1 // pred_fallthru
      _
    // Predicated region
    $region6: #{tpu_custom_call.1} parent=1 // pred_check
      _
    $region7: #{tpu_custom_call.1} parent=1 // pred_check_branch
      %27 = sbr.rel (0) target = $region9
    $region8: #{tpu_custom_call.1} parent=1 // pred_region
      %29 = vsyncadd [#allocation8], 0
      %s30 = sshll.u32 %s1, 4
      %s31 = int_to_ptr.hbm [resolvable:$true] %s30
      %s32 = sshll.u32 [#allocation7], 4
      %s33 = int_to_ptr.vmem [resolvable:$true] %s32
      %38 = dma.hbm_to_vmem [thread:$0]  %s31, 2048, %s33, [#allocation8], 128, 128, 8
    $region9: #{tpu_custom_call.1} parent=1 // pred_fallthru
      _
    // Predicated region
    $region10: #{tpu_custom_call.1} parent=1 // pred_check
      _
    $region11: #{tpu_custom_call.1} parent=1 // pred_check_branch
      %40 = sbr.rel (0) target = $region13
    $region12: #{tpu_custom_call.1} parent=1 // pred_region
      _
    $region13: #{tpu_custom_call.1} parent=1 // pred_fallthru
      _
    // Predicated region
    $region14: #{tpu_custom_call.1} parent=1 // pred_check
      _
    $region15: #{tpu_custom_call.1} parent=1 // pred_check_branch
      %42 = sbr.rel (0) target = $region17
    $region16: #{tpu_custom_call.1} parent=1 // pred_region
      %44 = vsyncadd [#allocation8], 0
      %s45 = sshll.u32 %s3, 4
      %s46 = int_to_ptr.hbm [resolvable:$true] %s45
      %s47 = sshll.u32 [#allocation9], 4
      %s48 = int_to_ptr.vmem [resolvable:$true] %s47
      %53 = dma.hbm_to_vmem [thread:$0]  %s46, 2048, %s48, [#allocation8], 128, 128, 8
    $region17: #{tpu_custom_call.1} parent=1 // pred_fallthru
      _
    // Predicated region
    $region18: #{tpu_custom_call.1} parent=1 // pred_check
      _
    $region19: #{tpu_custom_call.1} parent=1 // pred_check_branch
      %55 = sbr.rel (0) target = $region21
    $region20: #{tpu_custom_call.1} parent=1 // pred_region
      _
    $region21: #{tpu_custom_call.1} parent=1 // pred_fallthru
      _
    // Predicated region
    $region22: #{tpu_custom_call.1} parent=1 // pred_check
      _
    $region23: #{tpu_custom_call.1} parent=1 // pred_check_branch
      %57 = sbr.rel (0) target = $region25
    $region24: #{tpu_custom_call.1} parent=1 // pred_region
      _
    $region25: #{tpu_custom_call.1} parent=1 // pred_fallthru
      _
    // Predicated region
    $region26: #{tpu_custom_call.1} parent=1 // pred_check
      _
    $region27: #{tpu_custom_call.1} parent=1 // pred_check_branch
      %59 = sbr.rel (0) target = $region29
    $region28: #{tpu_custom_call.1} parent=1 // pred_region
      _
    $region29: #{tpu_custom_call.1} parent=1 // pred_fallthru
      _
    // Predicated region
    $region30: #{tpu_custom_call.1} parent=1 // pred_check
      _
    $region31: #{tpu_custom_call.1} parent=1 // pred_check_branch
      %61 = sbr.rel (0) target = $region33
    $region32: #{tpu_custom_call.1} parent=1 // pred_region
      %63 = dma.done [#allocation5], 128
    $region33: #{tpu_custom_call.1} parent=1 // pred_fallthru
      _
    // Predicated region
    $region34: #{tpu_custom_call.1} parent=1 // pred_check
      _
    $region35: #{tpu_custom_call.1} parent=1 // pred_check_branch
      %65 = sbr.rel (0) target = $region37
    $region36: #{tpu_custom_call.1} parent=1 // pred_region
      %67 = dma.done [#allocation8], 2048
    $region37: #{tpu_custom_call.1} parent=1 // pred_fallthru
      _
    // Predicated region
    $region38: #{tpu_custom_call.1} parent=1 // pred_check
      _
    $region39: #{tpu_custom_call.1} parent=1 // pred_check_branch
      %69 = sbr.rel (0) target = $region41
    $region40: #{tpu_custom_call.1} parent=1 // pred_region
      %71 = dma.done [#allocation8], 2048
    $region41: #{tpu_custom_call.1} parent=1 // pred_fallthru
      _
    %p72 = scmp.eq.s32.totalorder 0, 0
    // Predicated region
    $region42: #{tpu_custom_call.1} parent=1 // pred_check
      %p73 = pneg %p72
    $region43: #{tpu_custom_call.1} parent=1 // pred_check_branch
      %75 = sbr.rel (%p73) target = $region45
    $region44: #{tpu_custom_call.1} parent=1 // pred_region
      %76 = vst [vmem:[#allocation2] sm:$0xff] 0.0
      %77 = vst [vmem:[#allocation3] sm:$0xff] 0.0
    $region45: #{tpu_custom_call.1} parent=1 // pred_fallthru
      _
    %v78 = vld [vmem:[#allocation4] sm:$0xff]
    %v79 = vld [vmem:[#allocation2] sm:$0xff]
    %v80 = vld [vmem:[#allocation7] sm:$0xff]
    %v81 = vld [vmem:[#allocation7 + $0x8] sm:$0xff]
    %v82 = vld [vmem:[#allocation7 + $0x10] sm:$0xff]
    %v83 = vld [vmem:[#allocation7 + $0x18] sm:$0xff]
    %v84 = vld [vmem:[#allocation7 + $0x20] sm:$0xff]
    %v85 = vld [vmem:[#allocation7 + $0x28] sm:$0xff]
    %v86 = vld [vmem:[#allocation7 + $0x30] sm:$0xff]
    %v87 = vld [vmem:[#allocation7 + $0x38] sm:$0xff]
    %v88 = vld [vmem:[#allocation7 + $0x40] sm:$0xff]
    %v89 = vld [vmem:[#allocation7 + $0x48] sm:$0xff]
    %v90 = vld [vmem:[#allocation7 + $0x50] sm:$0xff]
    %v91 = vld [vmem:[#allocation7 + $0x58] sm:$0xff]
    %v92 = vld [vmem:[#allocation7 + $0x60] sm:$0xff]
    %v93 = vld [vmem:[#allocation7 + $0x68] sm:$0xff]
    %v94 = vld [vmem:[#allocation7 + $0x70] sm:$0xff]
    %v95 = vld [vmem:[#allocation7 + $0x78] sm:$0xff]
    %96 = vmatpush.msra.mxu0 %v95
    %97 = vmatpush.msra.mxu0 %v94
    %98 = vmatpush.msra.mxu0 %v93
    %99 = vmatpush.msra.mxu0 %v92
    %100 = vmatpush.msra.mxu0 %v91
    %101 = vmatpush.msra.mxu0 %v90
    %102 = vmatpush.msra.mxu0 %v89
    %103 = vmatpush.msra.mxu0 %v88
    %104 = vmatpush.msra.mxu0 %v87
    %105 = vmatpush.msra.mxu0 %v86
    %106 = vmatpush.msra.mxu0 %v85
    %107 = vmatpush.msra.mxu0 %v84
    %108 = vmatpush.msra.mxu0 %v83
    %109 = vmatpush.msra.mxu0 %v82
    %110 = vmatpush.msra.mxu0 %v81
    %111 = vmatpush.msra.mxu0 %v80
    %112 = vmatmul.f32.gmra.mxu0 %v78
    %v113 = vpop.f32.mrf.mxu0
    %v114 = vadd.f32 0.0, %v113
    %115 = vdwg.mxu0
    %v116 = vadd.f32 %v79, %v114
    %117 = vst [vmem:[#allocation2] sm:$0xff] %v116
    %v118 = vld [vmem:[#allocation3] sm:$0xff]
    %v119 = vld [vmem:[#allocation9] sm:$0xff]
    %v120 = vld [vmem:[#allocation9 + $0x8] sm:$0xff]
    %v121 = vld [vmem:[#allocation9 + $0x10] sm:$0xff]
    %v122 = vld [vmem:[#allocation9 + $0x18] sm:$0xff]
    %v123 = vld [vmem:[#allocation9 + $0x20] sm:$0xff]
    %v124 = vld [vmem:[#allocation9 + $0x28] sm:$0xff]
    %v125 = vld [vmem:[#allocation9 + $0x30] sm:$0xff]
    %v126 = vld [vmem:[#allocation9 + $0x38] sm:$0xff]
    %v127 = vld [vmem:[#allocation9 + $0x40] sm:$0xff]
    %v128 = vld [vmem:[#allocation9 + $0x48] sm:$0xff]
    %v129 = vld [vmem:[#allocation9 + $0x50] sm:$0xff]
    %v130 = vld [vmem:[#allocation9 + $0x58] sm:$0xff]
    %v131 = vld [vmem:[#allocation9 + $0x60] sm:$0xff]
    %v132 = vld [vmem:[#allocation9 + $0x68] sm:$0xff]
    %v133 = vld [vmem:[#allocation9 + $0x70] sm:$0xff]
    %v134 = vld [vmem:[#allocation9 + $0x78] sm:$0xff]
    %135 = vmatpush.msra.mxu0 %v134
    %136 = vmatpush.msra.mxu0 %v133
    %137 = vmatpush.msra.mxu0 %v132
    %138 = vmatpush.msra.mxu0 %v131
    %139 = vmatpush.msra.mxu0 %v130
    %140 = vmatpush.msra.mxu0 %v129
    %141 = vmatpush.msra.mxu0 %v128
    %142 = vmatpush.msra.mxu0 %v127
    %143 = vmatpush.msra.mxu0 %v126
    %144 = vmatpush.msra.mxu0 %v125
    %145 = vmatpush.msra.mxu0 %v124
    %146 = vmatpush.msra.mxu0 %v123
    %147 = vmatpush.msra.mxu0 %v122
    %148 = vmatpush.msra.mxu0 %v121
    %149 = vmatpush.msra.mxu0 %v120
    %150 = vmatpush.msra.mxu0 %v119
    %151 = vmatmul.f32.gmra.mxu0 %v78
    %v152 = vpop.f32.mrf.mxu0
    %v153 = vadd.f32 0.0, %v152
    %154 = vdwg.mxu0
    %v155 = vadd.f32 %v118, %v153
    %156 = vst [vmem:[#allocation3] sm:$0xff] %v155
    // Predicated region
    $region46: #{tpu_custom_call.1} parent=1 // pred_check
      %p157 = pneg %p72
    $region47: #{tpu_custom_call.1} parent=1 // pred_check_branch
      %159 = sbr.rel (%p157) target = $region49
    $region48: #{tpu_custom_call.1} parent=1 // pred_region
      %v160 = vld [vmem:[#allocation2] sm:$0xff]
      %v161 = vld [vmem:[%s2] sm:$0x1]
      %v163 = vperm.slane %v161, 0
      %v165 = vadd.f32 %v160, %v163
      %v166 = vld [vmem:[#allocation3] sm:$0xff]
      %v167 = vld [vmem:[%s4] sm:$0x1]
      %v169 = vperm.slane %v167, 0
      %v171 = vadd.f32 %v166, %v169
      %v172 = vmax.f32 %v165, %v171
      %v173 = vld [vmem:[%s5] sm:$0x1]
      %v175 = vperm.slane %v173, 0
      %v177 = vmul.f32 %v172, %v175
      %v178 = vld [vmem:[%s6] sm:$0x1]
      %v180 = vperm.slane %v178, 0
      %v182 = vadd.f32 %v177, %v180
      %183 = vst [vmem:[#allocation10] sm:$0xff] %v182
    $region49: #{tpu_custom_call.1} parent=1 // pred_fallthru
      _
    // Predicated region
    $region50: #{tpu_custom_call.1} parent=1 // pred_check
      _
    $region51: #{tpu_custom_call.1} parent=1 // pred_check_branch
      %185 = sbr.rel (0) target = $region53
    $region52: #{tpu_custom_call.1} parent=1 // pred_region
      %187 = vsyncadd [#allocation6], 0
      %s189 = sshll.u32 [#allocation10], 4
      %s190 = int_to_ptr.vmem [resolvable:$true] %s189
      %s191 = sshll.u32 %s7, 4
      %s192 = int_to_ptr.hbm [resolvable:$true] %s191
      %194 = dma.vmem_to_hbm [thread:$0]  %s190, 128, %s192, [#allocation6]
    $region53: #{tpu_custom_call.1} parent=1 // pred_fallthru
      _
    // Predicated region
    $region54: #{tpu_custom_call.1} parent=1 // pred_check
      _
    $region55: #{tpu_custom_call.1} parent=1 // pred_check_branch
      %196 = sbr.rel (0) target = $region57
    $region56: #{tpu_custom_call.1} parent=1 // pred_region
      %198 = dma.done [#allocation6], 128
    $region57: #{tpu_custom_call.1} parent=1 // pred_fallthru
      _
    %199 = vsyncpa [#allocation5], 1
    %200 = vsyncpa [#allocation8], 1
    %201 = vsyncpa [#allocation6], 1

</llo_original>
